<compile_context>
chip_gen: v7x
topology: tpu7x:2x2x1
jax: 0.10.0
libtpu: 0.0.40
codegen_flags: <defaults>
</compile_context>

<pallas_src>
import functools

import jax
import jax.numpy as jnp
from jax.experimental import pallas as pl
from jax.experimental.pallas import tpu as pltpu


def _round_up(x, m):
    return (x + m - 1) // m * m


def _leaky_relu(x, slope=0.2):
    return jnp.where(x > 0, x, slope * x)


def _make_kernel(final_on_vpu):
    """Builds the per-tile kernel. `final_on_vpu` is a trace-time flag."""

    def kernel(x_ref, w1_ref, b1_ref, w2_ref, b2_ref, w3_ref, b3_ref, o_ref):
        # Layer 1: Linear(256 -> 64) + LeakyReLU(0.2). bf16 inputs, f32 acc.
        h1 = jnp.dot(x_ref[...], w1_ref[...],
                     preferred_element_type=jnp.float32) + b1_ref[...]
        h1 = _leaky_relu(h1)

        # Layer 2: Linear(64 -> 16) + LeakyReLU(0.2). f32.
        h2 = jnp.dot(h1, w2_ref[...],
                     preferred_element_type=jnp.float32) + b2_ref[...]
        h2 = _leaky_relu(h2)

        # Layer 3: Linear(16 -> out_dims).
        if final_on_vpu:
            # out_dims == 1: w3_ref holds w3.T with shape (1, 16). A K=16,N=1
            # MXU matmul is pure push/drain latency; do it on VPU + XLU reduce.
            h3 = jnp.sum(h2 * w3_ref[...], axis=-1, keepdims=True) + b3_ref[...]
        else:
            h3 = jnp.dot(h2, w3_ref[...],
                         preferred_element_type=jnp.float32) + b3_ref[...]

        # LogSoftmax over the feature dim (matches nn.LogSoftmax on 2-D input).
        # For out_dims == 1 this is identically zero, same as PyTorch.
        m = jnp.max(h3, axis=-1, keepdims=True)
        s = h3 - m
        lse = jnp.log(jnp.sum(jnp.exp(s), axis=-1, keepdims=True))
        o_ref[...] = (s - lse).astype(o_ref.dtype)

    return kernel


@functools.partial(jax.jit, static_argnames=("tb",))
def discriminator_forward(x, params, *, tb=4096):
    w1, b1, w2, b2, w3, b3 = params
    B, F = x.shape
    H = w1.shape[1]
    M = w2.shape[1]
    out_dims = w3.shape[1]

    # bf16 for the big HBM stream (x) and the first weight; f32 accumulation.
    x = x.astype(jnp.bfloat16)
    w1 = w1.astype(jnp.bfloat16)

    # Batch tiling: TB rows per grid step (multiple of 8 sublanes).
    TB = min(tb, _round_up(B, 8))
    B_pad = _round_up(B, TB)
    if B_pad != B:
        x = jnp.pad(x, ((0, B_pad - B), (0, 0)))
    grid = (B_pad // TB,)

    final_on_vpu = (out_dims == 1)
    w3_arg = jnp.transpose(w3) if final_on_vpu else w3  # (1,16) or (16,out)

    kernel = _make_kernel(final_on_vpu)

    const = lambda i: (0, 0)  # weights/biases: one block, resident in VMEM
    in_specs = [
        pl.BlockSpec((TB, F), lambda i: (i, 0)),      # x   (streamed tiles)
        pl.BlockSpec(w1.shape, const),                # w1
        pl.BlockSpec(b1.shape, const),                # b1
        pl.BlockSpec(w2.shape, const),                # w2
        pl.BlockSpec(b2.shape, const),                # b2
        pl.BlockSpec(w3_arg.shape, const),            # w3 (maybe transposed)
        pl.BlockSpec(b3.shape, const),                # b3
    ]
    out_specs = pl.BlockSpec((TB, out_dims), lambda i: (i, 0))

    param_bytes = sum(int(p.size) * p.dtype.itemsize
                      for p in (w1, b1, w2, b2, w3_arg, b3))
    cost = pl.CostEstimate(
        flops=2 * B_pad * (F * H + H * M + M * out_dims),
        transcendentals=B_pad * (out_dims + 1),
        bytes_accessed=B_pad * F * 2 + B_pad * out_dims * 4 + param_bytes,
    )

    out = pl.pallas_call(
        kernel,
        out_shape=jax.ShapeDtypeStruct((B_pad, out_dims), jnp.float32),
        grid=grid,
        in_specs=in_specs,
        out_specs=out_specs,
        compiler_params=pltpu.CompilerParams(
            dimension_semantics=("parallel",),
            vmem_limit_bytes=32 * 1024 * 1024,
        ),
        cost_estimate=cost,
    )(x, w1, b1, w2, b2, w3_arg, b3)

    return out[:B]


def init_params(key, input_dims=256, hidden_dims=64, output_dims=1):
    """weights_init: Linear weights ~ N(0, 0.02), biases = 0."""
    k1, k2, k3 = jax.random.split(key, 3)
    w1 = 0.02 * jax.random.normal(k1, (input_dims, hidden_dims), jnp.float32)
    b1 = jnp.zeros((1, hidden_dims), jnp.float32)
    w2 = 0.02 * jax.random.normal(k2, (hidden_dims, 16), jnp.float32)
    b2 = jnp.zeros((1, 16), jnp.float32)
    w3 = 0.02 * jax.random.normal(k3, (16, output_dims), jnp.float32)
    b3 = jnp.zeros((1, output_dims), jnp.float32)
    return (w1, b1, w2, b2, w3, b3)


def reference_forward(x, params):
    """Pure-f32 JAX reference matching the PyTorch module."""
    w1, b1, w2, b2, w3, b3 = params
    h1 = _leaky_relu(x @ w1 + b1)
    h2 = _leaky_relu(h1 @ w2 + b2)
    h3 = h2 @ w3 + b3
    return jax.nn.log_softmax(h3, axis=-1)


if __name__ == "__main__":
    key = jax.random.PRNGKey(0)
    k_param, k_x, k_param2, k_x2 = jax.random.split(key, 4)

    # --- Test 1: module defaults (input=256, hidden=64, out=1), small batch.
    params = init_params(k_param, 256, 64, 1)
    x = jax.random.normal(k_x, (8, 256), jnp.float32)
    out = jax.block_until_ready(discriminator_forward(x, params))
    ref = reference_forward(x, params)
    assert out.shape == (8, 1)
    assert jnp.allclose(out, ref, atol=2e-3, rtol=1e-3)

    # --- Test 2: out_dims > 1 (real log_softmax + MXU final layer),
    #     non-multiple-of-8 batch + multi-tile grid (tb=8 -> 4 grid steps).
    params2 = init_params(k_param2, 256, 64, 4)
    x2 = jax.random.normal(k_x2, (30, 256), jnp.float32)
    out2 = jax.block_until_ready(discriminator_forward(x2, params2, tb=8))
    ref2 = reference_forward(x2, params2)
    assert out2.shape == (30, 4)
    assert jnp.allclose(out2, ref2, atol=2e-3, rtol=1e-3)

    print("KERNEL_OK")
</pallas_src>

<mosaic_0001>
module attributes {stable_mosaic.version = 11 : i64} {
  func.func @kernel(%arg0: i32, %arg1: memref<8x256xbf16, #tpu.memory_space<vmem>>, %arg2: memref<256x64xbf16, #tpu.memory_space<vmem>>, %arg3: memref<1x64xf32, #tpu.memory_space<vmem>>, %arg4: memref<64x16xf32, #tpu.memory_space<vmem>>, %arg5: memref<1x16xf32, #tpu.memory_space<vmem>>, %arg6: memref<1x16xf32, #tpu.memory_space<vmem>>, %arg7: memref<1x1xf32, #tpu.memory_space<vmem>>, %arg8: memref<8x1xf32, #tpu.memory_space<vmem>>) attributes {dimension_semantics = [#tpu.dimension_semantics<parallel>], iteration_bounds = array<i64: 1>, scalar_prefetch = 0 : i64, scratch_operands = 0 : i64, tpu.core_type = #tpu.core_type<tc>, window_params = [{transform_indices = @transform_0, window_bounds = array<i64: 8, 256>}, {pipeline_mode = #tpu.pipeline_mode<synchronous>, transform_indices = @transform_1, window_bounds = array<i64: 256, 64>}, {pipeline_mode = #tpu.pipeline_mode<synchronous>, transform_indices = @transform_2, window_bounds = array<i64: 1, 64>}, {pipeline_mode = #tpu.pipeline_mode<synchronous>, transform_indices = @transform_3, window_bounds = array<i64: 64, 16>}, {pipeline_mode = #tpu.pipeline_mode<synchronous>, transform_indices = @transform_4, window_bounds = array<i64: 1, 16>}, {pipeline_mode = #tpu.pipeline_mode<synchronous>, transform_indices = @transform_5, window_bounds = array<i64: 1, 16>}, {pipeline_mode = #tpu.pipeline_mode<synchronous>, transform_indices = @transform_6, window_bounds = array<i64: 1, 1>}, {transform_indices = @transform_7, window_bounds = array<i64: 8, 1>}]} {
    %c0 = arith.constant 0 : index
    %c0_0 = arith.constant 0 : index
    %0 = vector.load %arg1[%c0, %c0_0] : memref<8x256xbf16, #tpu.memory_space<vmem>>, vector<8x256xbf16>
    %c0_1 = arith.constant 0 : index
    %c0_2 = arith.constant 0 : index
    %1 = vector.load %arg2[%c0_1, %c0_2] : memref<256x64xbf16, #tpu.memory_space<vmem>>, vector<256x64xbf16>
    %cst = arith.constant dense<0.000000e+00> : vector<8x64xf32>
    %2 = tpu.matmul %0, %1, %cst {dimension_numbers = #tpu.dot_dimension_numbers<[1], [0], [0], [1], [0, 0, 1, 1], [], []>} : vector<8x256xbf16>, vector<256x64xbf16>, vector<8x64xf32> -> vector<8x64xf32>
    %c0_3 = arith.constant 0 : index
    %c0_4 = arith.constant 0 : index
    %3 = vector.load %arg3[%c0_3, %c0_4] : memref<1x64xf32, #tpu.memory_space<vmem>>, vector<1x64xf32>
    %4 = vector.broadcast %3 : vector<1x64xf32> to vector<8x64xf32>
    %5 = arith.addf %2, %4 : vector<8x64xf32>
    %cst_5 = arith.constant 0.000000e+00 : f32
    %6 = vector.broadcast %cst_5 : f32 to vector<8x64xf32>
    %7 = arith.cmpf ogt, %5, %6 : vector<8x64xf32>
    %cst_6 = arith.constant 2.000000e-01 : f32
    %8 = vector.broadcast %cst_6 : f32 to vector<8x64xf32>
    %9 = arith.mulf %8, %5 : vector<8x64xf32>
    %10 = arith.select %7, %5, %9 : vector<8x64xi1>, vector<8x64xf32>
    %c0_7 = arith.constant 0 : index
    %c0_8 = arith.constant 0 : index
    %11 = vector.load %arg4[%c0_7, %c0_8] : memref<64x16xf32, #tpu.memory_space<vmem>>, vector<64x16xf32>
    %cst_9 = arith.constant dense<0.000000e+00> : vector<8x16xf32>
    %12 = tpu.matmul %10, %11, %cst_9 {dimension_numbers = #tpu.dot_dimension_numbers<[1], [0], [0], [1], [0, 0, 1, 1], [], []>} : vector<8x64xf32>, vector<64x16xf32>, vector<8x16xf32> -> vector<8x16xf32>
    %c0_10 = arith.constant 0 : index
    %c0_11 = arith.constant 0 : index
    %13 = vector.load %arg5[%c0_10, %c0_11] : memref<1x16xf32, #tpu.memory_space<vmem>>, vector<1x16xf32>
    %14 = vector.broadcast %13 : vector<1x16xf32> to vector<8x16xf32>
    %15 = arith.addf %12, %14 : vector<8x16xf32>
    %cst_12 = arith.constant 0.000000e+00 : f32
    %16 = vector.broadcast %cst_12 : f32 to vector<8x16xf32>
    %17 = arith.cmpf ogt, %15, %16 : vector<8x16xf32>
    %cst_13 = arith.constant 2.000000e-01 : f32
    %18 = vector.broadcast %cst_13 : f32 to vector<8x16xf32>
    %19 = arith.mulf %18, %15 : vector<8x16xf32>
    %20 = arith.select %17, %15, %19 : vector<8x16xi1>, vector<8x16xf32>
    %c0_14 = arith.constant 0 : index
    %c0_15 = arith.constant 0 : index
    %21 = vector.load %arg6[%c0_14, %c0_15] : memref<1x16xf32, #tpu.memory_space<vmem>>, vector<1x16xf32>
    %22 = vector.broadcast %21 : vector<1x16xf32> to vector<8x16xf32>
    %23 = arith.mulf %20, %22 : vector<8x16xf32>
    %cst_16 = arith.constant dense<0.000000e+00> : vector<8xf32>
    %24 = vector.multi_reduction <add>, %23, %cst_16 [1] : vector<8x16xf32> to vector<8xf32>
    %25 = vector.shape_cast %24 : vector<8xf32> to vector<8x1xf32>
    %c0_17 = arith.constant 0 : index
    %c0_18 = arith.constant 0 : index
    %26 = vector.load %arg7[%c0_17, %c0_18] : memref<1x1xf32, #tpu.memory_space<vmem>>, vector<1x1xf32>
    %27 = vector.broadcast %26 : vector<1x1xf32> to vector<8x1xf32>
    %28 = arith.addf %25, %27 : vector<8x1xf32>
    %cst_19 = arith.constant dense<0xFF800000> : vector<8xf32>
    %29 = vector.multi_reduction <maximumf>, %28, %cst_19 [1] : vector<8x1xf32> to vector<8xf32>
    %30 = vector.shape_cast %29 : vector<8xf32> to vector<8x1xf32>
    %31 = arith.subf %28, %30 : vector<8x1xf32>
    %32 = math.exp %31 : vector<8x1xf32>
    %cst_20 = arith.constant dense<0.000000e+00> : vector<8xf32>
    %33 = vector.multi_reduction <add>, %32, %cst_20 [1] : vector<8x1xf32> to vector<8xf32>
    %34 = vector.shape_cast %33 : vector<8xf32> to vector<8x1xf32>
    %35 = math.log %34 : vector<8x1xf32>
    %36 = arith.subf %31, %35 : vector<8x1xf32>
    %c0_21 = arith.constant 0 : index
    %c0_22 = arith.constant 0 : index
    %37 = vector.load %arg8[%c0_21, %c0_22] : memref<8x1xf32, #tpu.memory_space<vmem>>, vector<8x1xf32>
    tpu.vector_store %arg8[%c0_21, %c0_22], %36 {strides = array<i32>} : memref<8x1xf32, #tpu.memory_space<vmem>>, vector<8x1xf32>,
    return
  }
  func.func @transform_0(%arg0: i32) -> (i32, i32) {
    %c0_i32 = arith.constant 0 : i32
    %c0_i32_0 = arith.constant 0 : i32
    return %arg0, %c0_i32 : i32, i32
  }
  func.func @transform_1(%arg0: i32) -> (i32, i32) {
    %c0_i32 = arith.constant 0 : i32
    %c0_i32_0 = arith.constant 0 : i32
    %c0_i32_1 = arith.constant 0 : i32
    return %c0_i32, %c0_i32_0 : i32, i32
  }
  func.func @transform_2(%arg0: i32) -> (i32, i32) {
    %c0_i32 = arith.constant 0 : i32
    %c0_i32_0 = arith.constant 0 : i32
    %c0_i32_1 = arith.constant 0 : i32
    return %c0_i32, %c0_i32_0 : i32, i32
  }
  func.func @transform_3(%arg0: i32) -> (i32, i32) {
    %c0_i32 = arith.constant 0 : i32
    %c0_i32_0 = arith.constant 0 : i32
    %c0_i32_1 = arith.constant 0 : i32
    return %c0_i32, %c0_i32_0 : i32, i32
  }
  func.func @transform_4(%arg0: i32) -> (i32, i32) {
    %c0_i32 = arith.constant 0 : i32
    %c0_i32_0 = arith.constant 0 : i32
    %c0_i32_1 = arith.constant 0 : i32
    return %c0_i32, %c0_i32_0 : i32, i32
  }
  func.func @transform_5(%arg0: i32) -> (i32, i32) {
    %c0_i32 = arith.constant 0 : i32
    %c0_i32_0 = arith.constant 0 : i32
    %c0_i32_1 = arith.constant 0 : i32
    return %c0_i32, %c0_i32_0 : i32, i32
  }
  func.func @transform_6(%arg0: i32) -> (i32, i32) {
    %c0_i32 = arith.constant 0 : i32
    %c0_i32_0 = arith.constant 0 : i32
    %c0_i32_1 = arith.constant 0 : i32
    return %c0_i32, %c0_i32_0 : i32, i32
  }
  func.func @transform_7(%arg0: i32) -> (i32, i32) {
    %c0_i32 = arith.constant 0 : i32
    %c0_i32_0 = arith.constant 0 : i32
    return %arg0, %c0_i32 : i32, i32
  }
}

</mosaic_0001>

<llo_original>
// kernel: discriminator_forward.1
$region0: #{discriminator_forward.1}
  #allocation0 [shape = 'u32[]', space=smem, size = 0x4, offset = 0x4, fixed_abs, tag = 'smem constant byte address 0x4 - core index']
  #allocation1 [shape = 'u32[144,128]{1,0:T(1,128)}', space=vmem, size = 0x12000, scoped, tag = 'internal scratch']
  #allocation2 [shape = 'f32[1,1]{1,0:T(1,128)S(1)}', space=vmem, size = 0x200, scoped, tag = 'scoped memory for discriminator_forward.1']
  %s0 = inlined_call_operand.vmem [shape: bf16[8,256], index: 0, kind: input, shape index: {}]
  %s1 = inlined_call_operand.vmem [shape: bf16[256,64], index: 1, kind: input, shape index: {}]
  %s2 = inlined_call_operand.vmem [shape: f32[1,64], index: 2, kind: input, shape index: {}]
  %s3 = inlined_call_operand.vmem [shape: f32[64,16], index: 3, kind: input, shape index: {}]
  %s4 = inlined_call_operand.vmem [shape: f32[1,16], index: 4, kind: input, shape index: {}]
  %s5 = inlined_call_operand.vmem [shape: f32[1,16], index: 5, kind: input, shape index: {}]
  %s6 = inlined_call_operand.<no memory space> [shape: f32[1,1], index: 6, kind: input, shape index: {}]
  %s7 = inlined_call_operand.vmem [shape: f32[8,1], index: 7, kind: output, shape index: {}]
  %s8 = sld [smem:[#allocation0]]
  $region38: #{discriminator_forward.1} parent=0
    _
  %s10 = ssub.s32 1, %s8
  %s11 = scalar_select 0, %s10, %s8
  %v12 = vstv %s6
  %13 = vst [vmem:[#allocation2] sm:$0x1] %v12
  // Predicated region
  $region2: #{discriminator_forward.1} parent=0 // pred_check
    _
  $region3: #{discriminator_forward.1} parent=0 // pred_check_branch
    %15 = sbr.rel (0) target = $region5
  $region4: #{discriminator_forward.1} parent=0 // pred_region
    _
  $region5: #{discriminator_forward.1} parent=0 // pred_fallthru
    _
  // Predicated region
  $region6: #{discriminator_forward.1} parent=0 // pred_check
    _
  $region7: #{discriminator_forward.1} parent=0 // pred_check_branch
    %17 = sbr.rel (0) target = $region9
  $region8: #{discriminator_forward.1} parent=0 // pred_region
    _
  $region9: #{discriminator_forward.1} parent=0 // pred_fallthru
    _
  // Predicated region
  $region10: #{discriminator_forward.1} parent=0 // pred_check
    _
  $region11: #{discriminator_forward.1} parent=0 // pred_check_branch
    %19 = sbr.rel (0) target = $region13
  $region12: #{discriminator_forward.1} parent=0 // pred_region
    _
  $region13: #{discriminator_forward.1} parent=0 // pred_fallthru
    _
  // Predicated region
  $region14: #{discriminator_forward.1} parent=0 // pred_check
    _
  $region15: #{discriminator_forward.1} parent=0 // pred_check_branch
    %21 = sbr.rel (0) target = $region17
  $region16: #{discriminator_forward.1} parent=0 // pred_region
    _
  $region17: #{discriminator_forward.1} parent=0 // pred_fallthru
    _
  // Predicated region
  $region18: #{discriminator_forward.1} parent=0 // pred_check
    _
  $region19: #{discriminator_forward.1} parent=0 // pred_check_branch
    %23 = sbr.rel (0) target = $region21
  $region20: #{discriminator_forward.1} parent=0 // pred_region
    _
  $region21: #{discriminator_forward.1} parent=0 // pred_fallthru
    _
  // Predicated region
  $region22: #{discriminator_forward.1} parent=0 // pred_check
    _
  $region23: #{discriminator_forward.1} parent=0 // pred_check_branch
    %25 = sbr.rel (0) target = $region25
  $region24: #{discriminator_forward.1} parent=0 // pred_region
    _
  $region25: #{discriminator_forward.1} parent=0 // pred_fallthru
    _
  // Predicated region
  $region26: #{discriminator_forward.1} parent=0 // pred_check
    _
  $region27: #{discriminator_forward.1} parent=0 // pred_check_branch
    %27 = sbr.rel (0) target = $region29
  $region28: #{discriminator_forward.1} parent=0 // pred_region
    _
  $region29: #{discriminator_forward.1} parent=0 // pred_fallthru
    _
  %v29 = vld [vmem:[%s0] sm:$0xff]
  %v30 = vld [vmem:[%s1] sm:$0xf]
  %v31 = vld [vmem:[%s1 + $0x4] sm:$0xf]
  %v32 = vld [vmem:[%s1 + $0x8] sm:$0xf]
  %v33 = vld [vmem:[%s1 + $0xc] sm:$0xf]
  %v34 = vld [vmem:[%s1 + $0x10] sm:$0xf]
  %v35 = vld [vmem:[%s1 + $0x14] sm:$0xf]
  %v36 = vld [vmem:[%s1 + $0x18] sm:$0xf]
  %v37 = vld [vmem:[%s1 + $0x1c] sm:$0xf]
  %v38 = vld [vmem:[%s1 + $0x20] sm:$0xf]
  %v39 = vld [vmem:[%s1 + $0x24] sm:$0xf]
  %v40 = vld [vmem:[%s1 + $0x28] sm:$0xf]
  %v41 = vld [vmem:[%s1 + $0x2c] sm:$0xf]
  %v42 = vld [vmem:[%s1 + $0x30] sm:$0xf]
  %v43 = vld [vmem:[%s1 + $0x34] sm:$0xf]
  %v44 = vld [vmem:[%s1 + $0x38] sm:$0xf]
  %v45 = vld [vmem:[%s1 + $0x3c] sm:$0xf]
  %v46 = vld [vmem:[%s1 + $0x40] sm:$0xf]
  %v47 = vld [vmem:[%s1 + $0x44] sm:$0xf]
  %v48 = vld [vmem:[%s1 + $0x48] sm:$0xf]
  %v49 = vld [vmem:[%s1 + $0x4c] sm:$0xf]
  %v50 = vld [vmem:[%s1 + $0x50] sm:$0xf]
  %v51 = vld [vmem:[%s1 + $0x54] sm:$0xf]
  %v52 = vld [vmem:[%s1 + $0x58] sm:$0xf]
  %v53 = vld [vmem:[%s1 + $0x5c] sm:$0xf]
  %v54 = vld [vmem:[%s1 + $0x60] sm:$0xf]
  %v55 = vld [vmem:[%s1 + $0x64] sm:$0xf]
  %v56 = vld [vmem:[%s1 + $0x68] sm:$0xf]
  %v57 = vld [vmem:[%s1 + $0x6c] sm:$0xf]
  %v58 = vld [vmem:[%s1 + $0x70] sm:$0xf]
  %v59 = vld [vmem:[%s1 + $0x74] sm:$0xf]
  %v60 = vld [vmem:[%s1 + $0x78] sm:$0xf]
  %v61 = vld [vmem:[%s1 + $0x7c] sm:$0xf]
  %v62 = vld [vmem:[%s2] sm:$0x1]
  %v64 = vlaneseq
  %v65 = vshrl.u32 %v64, 7
  %v66 = vsub.s32 0, %v65
  %v67 = vrot.slane %v62, %v66
  %v70 = vunpack.c.l.b16 %v29
  %v71 = vunpack.c.h.b16 %v29
  %v72 = vpack.c.b16 %v70, %v70
  %v73 = vpack.c.b16 %v71, %v71
  %v108 = vunpack.c.l.b16 %v30
  %v109 = vunpack.c.l.b16 %v31
  %v110 = vunpack.c.l.b16 %v32
  %v111 = vunpack.c.l.b16 %v33
  %v112 = vunpack.c.l.b16 %v34
  %v113 = vunpack.c.l.b16 %v35
  %v114 = vunpack.c.l.b16 %v36
  %v115 = vunpack.c.l.b16 %v37
  %v116 = vunpack.c.l.b16 %v38
  %v117 = vunpack.c.l.b16 %v39
  %v118 = vunpack.c.l.b16 %v40
  %v119 = vunpack.c.l.b16 %v41
  %v120 = vunpack.c.l.b16 %v42
  %v121 = vunpack.c.l.b16 %v43
  %v122 = vunpack.c.l.b16 %v44
  %v123 = vunpack.c.l.b16 %v45
  %v124 = vunpack.c.l.b16 %v46
  %v125 = vunpack.c.l.b16 %v47
  %v126 = vunpack.c.l.b16 %v48
  %v127 = vunpack.c.l.b16 %v49
  %v128 = vunpack.c.l.b16 %v50
  %v129 = vunpack.c.l.b16 %v51
  %v130 = vunpack.c.l.b16 %v52
  %v131 = vunpack.c.l.b16 %v53
  %v132 = vunpack.c.l.b16 %v54
  %v133 = vunpack.c.l.b16 %v55
  %v134 = vunpack.c.l.b16 %v56
  %v135 = vunpack.c.l.b16 %v57
  %v136 = vunpack.c.l.b16 %v58
  %v137 = vunpack.c.l.b16 %v59
  %v138 = vunpack.c.l.b16 %v60
  %v139 = vunpack.c.l.b16 %v61
  %v140 = vpack.c.b16 %v109, %v108
  %v141 = vpack.c.b16 %v111, %v110
  %v142 = vpack.c.b16 %v113, %v112
  %v143 = vpack.c.b16 %v115, %v114
  %v144 = vpack.c.b16 %v117, %v116
  %v145 = vpack.c.b16 %v119, %v118
  %v146 = vpack.c.b16 %v121, %v120
  %v147 = vpack.c.b16 %v123, %v122
  %v148 = vpack.c.b16 %v125, %v124
  %v149 = vpack.c.b16 %v127, %v126
  %v150 = vpack.c.b16 %v129, %v128
  %v151 = vpack.c.b16 %v131, %v130
  %v152 = vpack.c.b16 %v133, %v132
  %v153 = vpack.c.b16 %v135, %v134
  %v154 = vpack.c.b16 %v137, %v136
  %v155 = vpack.c.b16 %v139, %v138
  %172 = vmatprep.subr.bf16.mxu0 0
  %173 = vmatpush1.bf16.msra.mxu0 %v140
  %174 = vmatprep.subr.bf16.mxu0 0
  %175 = vmatpush1.bf16.msra.mxu0 %v141
  %176 = vmatprep.subr.bf16.mxu0 0
  %177 = vmatpush1.bf16.msra.mxu0 %v142
  %178 = vmatprep.subr.bf16.mxu0 0
  %179 = vmatpush1.bf16.msra.mxu0 %v143
  %180 = vmatprep.subr.bf16.mxu0 0
  %181 = vmatpush1.bf16.msra.mxu0 %v144
  %182 = vmatprep.subr.bf16.mxu0 0
  %183 = vmatpush1.bf16.msra.mxu0 %v145
  %184 = vmatprep.subr.bf16.mxu0 0
  %185 = vmatpush1.bf16.msra.mxu0 %v146
  %186 = vmatprep.subr.bf16.mxu0 0
  %187 = vmatpush1.bf16.msra.mxu0 %v147
  %188 = vmatprep.subr.bf16.mxu0 0
  %189 = vmatpush1.bf16.msra.mxu0 %v148
  %190 = vmatprep.subr.bf16.mxu0 0
  %191 = vmatpush1.bf16.msra.mxu0 %v149
  %192 = vmatprep.subr.bf16.mxu0 0
  %193 = vmatpush1.bf16.msra.mxu0 %v150
  %194 = vmatprep.subr.bf16.mxu0 0
  %195 = vmatpush1.bf16.msra.mxu0 %v151
  %196 = vmatprep.subr.bf16.mxu0 0
  %197 = vmatpush1.bf16.msra.mxu0 %v152
  %198 = vmatprep.subr.bf16.mxu0 0
  %199 = vmatpush1.bf16.msra.mxu0 %v153
  %200 = vmatprep.subr.bf16.mxu0 0
  %201 = vmatpush1.bf16.msra.mxu0 %v154
  %202 = vmatprep.subr.bf16.mxu0 0
  %203 = vmatpush1.bf16.msra.mxu0 %v155
  %204 = vmatprep.mubr.bf16.mxu0 %v73
  %205 = vmatmul.mubr.bf16.gmra.mrb[0].mxu0 %v72
  %v206 = vpop.f32.mrb[0].mxu0
  %v207 = vadd.f32 %v67, %v206
  %v208 = vpop.f32.mrb[0].mxu0
  %v209 = vpop.f32.mrb[0].mxu0
  %v210 = vpop.f32.mrb[0].mxu0
  %211 = vdwg.mxu0
  %vm212 = vcmp.gt.f32.partialorder %v207, 0.0
  %v213 = vmul.f32 %v207, 0.2
  %v214 = vsel %vm212, %v207, %v213
  %v215 = vld [vmem:[%s3] sm:$0xff]
  %v216 = vld [vmem:[%s3 + $0x8] sm:$0xff]
  %v217 = vld [vmem:[%s3 + $0x10] sm:$0xff]
  %v218 = vld [vmem:[%s3 + $0x18] sm:$0xff]
  %v219 = vld [vmem:[%s3 + $0x20] sm:$0xff]
  %v220 = vld [vmem:[%s3 + $0x28] sm:$0xff]
  %v221 = vld [vmem:[%s3 + $0x30] sm:$0xff]
  %v222 = vld [vmem:[%s3 + $0x38] sm:$0xff]
  %v223 = vld [vmem:[%s4] sm:$0x1]
  %v225 = vlaneseq
  %v226 = vshrl.u32 %v225, 7
  %v227 = vsub.s32 0, %v226
  %v228 = vrot.slane %v223, %v227
  %vm230 = vcmask 523264
  %v232 = vsel %vm230, %v214, 0
  %234 = vmatprep.subr.mxu0 0.0
  %235 = vmatpush1.msra.mxu0 %v215
  %236 = vmatprep.subr.mxu0 0.0
  %237 = vmatpush1.msra.mxu0 %v216
  %238 = vmatprep.subr.mxu0 0.0
  %239 = vmatpush1.msra.mxu0 %v217
  %240 = vmatprep.subr.mxu0 0.0
  %241 = vmatpush1.msra.mxu0 %v218
  %242 = vmatprep.subr.mxu0 0.0
  %243 = vmatpush1.msra.mxu0 %v219
  %244 = vmatprep.subr.mxu0 0.0
  %245 = vmatpush1.msra.mxu0 %v220
  %246 = vmatprep.subr.mxu0 0.0
  %247 = vmatpush1.msra.mxu0 %v221
  %248 = vmatprep.subr.mxu0 0.0
  %249 = vmatpush1.msra.mxu0 %v222
  %250 = vmatprep.subr.mxu0 0.0
  %251 = vmatpush1.msra.mxu0 0.0
  %252 = vmatprep.subr.mxu0 0.0
  %253 = vmatpush1.msra.mxu0 0.0
  %254 = vmatprep.subr.mxu0 0.0
  %255 = vmatpush1.msra.mxu0 0.0
  %256 = vmatprep.subr.mxu0 0.0
  %257 = vmatpush1.msra.mxu0 0.0
  %258 = vmatprep.subr.mxu0 0.0
  %259 = vmatpush1.msra.mxu0 0.0
  %260 = vmatprep.subr.mxu0 0.0
  %261 = vmatpush1.msra.mxu0 0.0
  %262 = vmatprep.subr.mxu0 0.0
  %263 = vmatpush1.msra.mxu0 0.0
  %264 = vmatprep.subr.mxu0 0.0
  %265 = vmatpush1.msra.mxu0 0.0
  %266 = vmatprep.subr.mxu0 0.0
  %267 = vmatpush1.msra.mxu0 0.0
  %268 = vmatprep.subr.mxu0 0.0
  %269 = vmatpush1.msra.mxu0 0.0
  %270 = vmatprep.subr.mxu0 0.0
  %271 = vmatpush1.msra.mxu0 0.0
  %272 = vmatprep.subr.mxu0 0.0
  %273 = vmatpush1.msra.mxu0 0.0
  %274 = vmatprep.subr.mxu0 0.0
  %275 = vmatpush1.msra.mxu0 0.0
  %276 = vmatprep.subr.mxu0 0.0
  %277 = vmatpush1.msra.mxu0 0.0
  %278 = vmatprep.subr.mxu0 0.0
  %279 = vmatpush1.msra.mxu0 0.0
  %280 = vmatprep.subr.mxu0 0.0
  %281 = vmatpush1.msra.mxu0 0.0
  %282 = vmatprep.subr.mxu0 0.0
  %283 = vmatpush1.msra.mxu0 0.0
  %284 = vmatprep.subr.mxu0 0.0
  %285 = vmatpush1.msra.mxu0 0.0
  %286 = vmatprep.subr.mxu0 0.0
  %287 = vmatpush1.msra.mxu0 0.0
  %288 = vmatprep.subr.mxu0 0.0
  %289 = vmatpush1.msra.mxu0 0.0
  %290 = vmatprep.subr.mxu0 0.0
  %291 = vmatpush1.msra.mxu0 0.0
  %292 = vmatprep.subr.mxu0 0.0
  %293 = vmatpush1.msra.mxu0 0.0
  %294 = vmatprep.subr.mxu0 0.0
  %295 = vmatpush1.msra.mxu0 0.0
  %296 = vmatprep.subr.mxu0 0.0
  %297 = vmatpush1.msra.mxu0 0.0
  %298 = vmatprep.mubr.f32.mxu0 0.0
  %299 = vmatmul.mubr.f32.gmra.mrb[0].mxu0 %v232
  %v300 = vpop.f32.mrb[0].mxu0
  %v301 = vadd.f32 %v228, %v300
  %v302 = vpop.f32.mrb[0].mxu0
  %303 = vdwg.mxu0
  %vm304 = vcmp.gt.f32.partialorder %v301, 0.0
  %v305 = vmul.f32 %v301, 0.2
  %v306 = vsel %vm304, %v301, %v305
  %v307 = vld [vmem:[%s5] sm:$0x1]
  %v309 = vlaneseq
  %v310 = vshrl.u32 %v309, 7
  %v311 = vsub.s32 0, %v310
  %v312 = vrot.slane %v307, %v311
  %v314 = vmul.f32 %v306, %v312
  %vm315 = vcmask 130048
  %v316 = vsel %vm315, %v314, 0.0
  %317 = vadd.xlane.f32.xlu0 %v316
  %v318 = vpop.xlane.xlu0 %317
  %v319 = vld [vmem:[#allocation2] sm:$0x1]
  %v321 = vlaneseq
  %v322 = vshrl.u32 %v321, 7
  %v323 = vsub.s32 0, %v322
  %v324 = vrot.slane %v319, %v323
  %v326 = vadd.f32 %v318, %v324
  %v327 = vsub.f32 %v326, %v326
  %v328 = vmul.f32 %v327, 1.442695
  %v329 = vpow.pop %v328
  %v330 = vadd.f32 %v329, 0.0
  %v331 = vlog2.pop %v330
  %v332 = vmul.f32 %v331, 0.6931472
  %v333 = vsub.f32 %v327, %v332
  %vm334 = vcmask 7168
  %335 = vst.msk [vmem:[%s7] sm:$0xff] %vm334, %v333
  // Predicated region
  $region30: #{discriminator_forward.1} parent=0 // pred_check
    _
  $region31: #{discriminator_forward.1} parent=0 // pred_check_branch
    %337 = sbr.rel (0) target = $region33
  $region32: #{discriminator_forward.1} parent=0 // pred_region
    _
  $region33: #{discriminator_forward.1} parent=0 // pred_fallthru
    _
  // Predicated region
  $region34: #{discriminator_forward.1} parent=0 // pred_check
    _
  $region35: #{discriminator_forward.1} parent=0 // pred_check_branch
    %339 = sbr.rel (0) target = $region37
  $region36: #{discriminator_forward.1} parent=0 // pred_region
    _
  $region37: #{discriminator_forward.1} parent=0 // pred_fallthru
    _

</llo_original>
